<compile_context>
chip_gen: v6e
topology: v6e:2x2x1
jax: 0.10.0
libtpu: 0.0.40
codegen_flags: <defaults>
</compile_context>

<pallas_src>
import jax
import jax.numpy as jnp
from jax.experimental import pallas as pl
from jax.experimental.pallas import tpu as pltpu


def net_fwd_kernel(x_ref, w1_ref, b1_ref, w2_ref, b2_ref, w3_ref, b3_ref, o_ref):
    # Layer A: fused rule/data encoder layer 1  -> [rh | dh], ReLU.
    h = jnp.dot(x_ref[...], w1_ref[...],
                preferred_element_type=jnp.float32) + b1_ref[...]
    h = jnp.maximum(h, 0.0)

    # Layer B: (encoder layer 2  o  alpha-weighted 'cat' merge  o  decision layer 1)
    # pre-folded in the wrapper into one weight; ReLU.
    h = jnp.dot(h.astype(w2_ref.dtype), w2_ref[...],
                preferred_element_type=jnp.float32) + b2_ref[...]
    h = jnp.maximum(h, 0.0)

    # Layer C: decision layer 2 + Sigmoid.
    logits = jnp.dot(h.astype(w3_ref.dtype), w3_ref[...],
                     preferred_element_type=jnp.float32) + b3_ref[...]
    # TODO(synk): out_dim=1 -> masked vst.msk stores; lane-dense output layout only worth it
    #             if a bundle dump shows the store slot binding (it does not here).
    o_ref[...] = jax.nn.sigmoid(logits).astype(o_ref.dtype)


def _round_up(v, m):
    return ((v + m - 1) // m) * m


def net_forward(x, params, alpha=0.0, *, max_tile_m=8192, min_grid_steps=2,
                compute_dtype=jnp.bfloat16):
    """Pallas equivalent of Net.forward(x, alpha) for merge='cat', skip=False."""
    M, in_dim = x.shape
    rw1, rb1, rw2, rb2 = params["rule"]
    dw1, db1, dw2, db2 = params["data"]
    cw1, cb1, cw2, cb2 = params["dec"]
    enc_out = rw2.shape[1]
    out_dim = cw2.shape[1]

    alpha = jnp.asarray(alpha, jnp.float32)

    # ---- Wrapper-side algebraic fusion of the tiny weights (exact; zero kernel cost) ----
    # (1) Both encoders share LHS x -> one first-layer matmul producing [rh | dh].
    w1 = jnp.concatenate([rw1, dw1], axis=1)                           # (in_dim, 2H)
    b1 = jnp.concatenate([rb1, db1], axis=1)                           # (1, 2H)
    # (2) cat(a*rz,(1-a)*dz) @ cw1  ==  [rh|dh] @ concat(a*rw2@cw1_r, (1-a)*dw2@cw1_d)
    #                                    + a*rb2@cw1_r + (1-a)*db2@cw1_d
    cw1_r, cw1_d = cw1[:enc_out], cw1[enc_out:]
    w2 = jnp.concatenate([alpha * (rw2 @ cw1_r),
                          (1.0 - alpha) * (dw2 @ cw1_d)], axis=0)      # (2H, dec_hidden)
    b2 = alpha * (rb2 @ cw1_r) + (1.0 - alpha) * (db2 @ cw1_d) + cb1   # (1, dec_hidden)
    # (3) Final decision layer unchanged.
    w3, b3 = cw2, cb2

    # bf16 (or requested dtype) matmul operands, f32 accumulation + f32 biases.
    x_in = x.astype(compute_dtype)
    w1, w2, w3 = (w.astype(compute_dtype) for w in (w1, w2, w3))
    b1, b2, b3 = (b.astype(jnp.float32) for b in (b1, b2, b3))

    # ---- Row tiling: lane-dense (tile_m, in_dim) blocks of x over a 1-D "parallel" grid.
    # Split into >= min_grid_steps blocks (when M allows) so v7x's 2 TensorCores both work;
    # tile_m is a multiple of 8 (sublane rule) or the full extent.
    max_tile_m = max(8, (max_tile_m // 8) * 8)
    if M <= 8:
        tile_m = M
    else:
        tile_m = min(max_tile_m, _round_up(pl.cdiv(M, max(1, min_grid_steps)), 8))
        tile_m = min(tile_m, _round_up(M, 8))
    grid = (pl.cdiv(M, tile_m),)

    weights = (w1, b1, w2, b2, w3, b3)

    def full_spec(a):
        return pl.BlockSpec(a.shape, lambda i: (0, 0))   # all fused params are 2-D

    return pl.pallas_call(
        net_fwd_kernel,
        out_shape=jax.ShapeDtypeStruct((M, out_dim), x.dtype),
        grid=grid,
        in_specs=[pl.BlockSpec((tile_m, in_dim), lambda i: (i, 0))]   # x row tiles
                 + [full_spec(w) for w in weights],                   # tiny fused params
        out_specs=pl.BlockSpec((tile_m, out_dim), lambda i: (i, 0)),
        compiler_params=pltpu.CompilerParams(dimension_semantics=("parallel",)),
    )(x_in, *weights)


def net_forward_ref(x, params, alpha=0.0):
    """Pure-JAX reference mirroring the PyTorch Net.forward (merge='cat', skip=False)."""
    rw1, rb1, rw2, rb2 = params["rule"]
    dw1, db1, dw2, db2 = params["data"]
    cw1, cb1, cw2, cb2 = params["dec"]
    rz = jnp.maximum(x @ rw1 + rb1, 0.0) @ rw2 + rb2
    dz = jnp.maximum(x @ dw1 + db1, 0.0) @ dw2 + db2
    z = jnp.concatenate([alpha * rz, (1.0 - alpha) * dz], axis=-1)
    h = jnp.maximum(z @ cw1 + cb1, 0.0)
    return jax.nn.sigmoid(h @ cw2 + cb2)


def init_params(key, input_dim, enc_hidden, enc_out, dec_hidden, output_dim):
    ks = jax.random.split(key, 12)

    def lin(kw, kb, din, dout):
        w = jax.random.normal(kw, (din, dout), jnp.float32) / jnp.sqrt(din)
        b = 0.1 * jax.random.normal(kb, (1, dout), jnp.float32)
        return w, b

    rw1, rb1 = lin(ks[0], ks[1], input_dim, enc_hidden)
    rw2, rb2 = lin(ks[2], ks[3], enc_hidden, enc_out)
    dw1, db1 = lin(ks[4], ks[5], input_dim, enc_hidden)
    dw2, db2 = lin(ks[6], ks[7], enc_hidden, enc_out)
    cw1, cb1 = lin(ks[8], ks[9], 2 * enc_out, dec_hidden)   # merge='cat' -> 2*enc_out
    cw2, cb2 = lin(ks[10], ks[11], dec_hidden, output_dim)
    return {"rule": (rw1, rb1, rw2, rb2),
            "data": (dw1, db1, dw2, db2),
            "dec": (cw1, cb1, cw2, cb2)}


if __name__ == "__main__":
    key = jax.random.PRNGKey(0)
    kx, kp, kx2 = jax.random.split(key, 3)

    # Shapes consistent with the module defaults:
    # batch=8, input_dim=32, encoder hidden=8, encoder output_dim=4,
    # decision hidden_dim=4, output_dim=1.
    batch, input_dim = 8, 32
    enc_hidden, enc_out = 8, 4
    dec_hidden, output_dim = 4, 1
    alpha = 0.2

    params = init_params(kp, input_dim, enc_hidden, enc_out, dec_hidden, output_dim)
    x = jax.random.normal(kx, (batch, input_dim), dtype=jnp.float32)
    y_ref = net_forward_ref(x, params, alpha)

    # f32 compute path: exact (algebraic fusions only) -> tight tolerance.
    y_f32 = jax.block_until_ready(net_forward(x, params, alpha, compute_dtype=jnp.float32))
    assert y_f32.shape == (batch, output_dim) and y_f32.dtype == x.dtype
    assert jnp.allclose(y_f32, y_ref, atol=1e-5, rtol=1e-5)

    # Default bf16-operand / f32-accumulate path -> looser tolerance.
    y_bf16 = jax.block_until_ready(net_forward(x, params, alpha))
    assert y_bf16.shape == (batch, output_dim) and y_bf16.dtype == x.dtype
    assert jnp.allclose(y_bf16, y_ref, atol=5e-2, rtol=5e-2)

    # Larger batch exercising the multi-step "parallel" grid (tile_m=24, 2 grid steps).
    x2 = jax.random.normal(kx2, (48, input_dim), dtype=jnp.float32)
    y2 = jax.block_until_ready(net_forward(x2, params, alpha, compute_dtype=jnp.float32))
    assert jnp.allclose(y2, net_forward_ref(x2, params, alpha), atol=1e-5, rtol=1e-5)

    print("KERNEL_OK")
</pallas_src>

<mosaic_0001>
module attributes {stable_mosaic.version = 11 : i64} {
  func.func @net_fwd_kernel(%arg0: i32, %arg1: memref<8x32xf32, #tpu.memory_space<vmem>>, %arg2: memref<32x16xf32, #tpu.memory_space<vmem>>, %arg3: memref<1x16xf32, #tpu.memory_space<vmem>>, %arg4: memref<16x4xf32, #tpu.memory_space<vmem>>, %arg5: memref<1x4xf32, #tpu.memory_space<vmem>>, %arg6: memref<4x1xf32, #tpu.memory_space<vmem>>, %arg7: memref<1x1xf32, #tpu.memory_space<vmem>>, %arg8: memref<8x1xf32, #tpu.memory_space<vmem>>) attributes {dimension_semantics = [#tpu.dimension_semantics<parallel>], iteration_bounds = array<i64: 1>, scalar_prefetch = 0 : i64, scratch_operands = 0 : i64, tpu.core_type = #tpu.core_type<tc>, window_params = [{transform_indices = @transform_0, window_bounds = array<i64: 8, 32>}, {pipeline_mode = #tpu.pipeline_mode<synchronous>, transform_indices = @transform_1, window_bounds = array<i64: 32, 16>}, {pipeline_mode = #tpu.pipeline_mode<synchronous>, transform_indices = @transform_2, window_bounds = array<i64: 1, 16>}, {pipeline_mode = #tpu.pipeline_mode<synchronous>, transform_indices = @transform_3, window_bounds = array<i64: 16, 4>}, {pipeline_mode = #tpu.pipeline_mode<synchronous>, transform_indices = @transform_4, window_bounds = array<i64: 1, 4>}, {pipeline_mode = #tpu.pipeline_mode<synchronous>, transform_indices = @transform_5, window_bounds = array<i64: 4, 1>}, {pipeline_mode = #tpu.pipeline_mode<synchronous>, transform_indices = @transform_6, window_bounds = array<i64: 1, 1>}, {transform_indices = @transform_7, window_bounds = array<i64: 8, 1>}]} {
    %c0 = arith.constant 0 : index
    %c0_0 = arith.constant 0 : index
    %0 = vector.load %arg1[%c0, %c0_0] : memref<8x32xf32, #tpu.memory_space<vmem>>, vector<8x32xf32>
    %c0_1 = arith.constant 0 : index
    %c0_2 = arith.constant 0 : index
    %1 = vector.load %arg2[%c0_1, %c0_2] : memref<32x16xf32, #tpu.memory_space<vmem>>, vector<32x16xf32>
    %cst = arith.constant dense<0.000000e+00> : vector<8x16xf32>
    %2 = tpu.matmul %0, %1, %cst {dimension_numbers = #tpu.dot_dimension_numbers<[1], [0], [0], [1], [0, 0, 1, 1], [], []>} : vector<8x32xf32>, vector<32x16xf32>, vector<8x16xf32> -> vector<8x16xf32>
    %c0_3 = arith.constant 0 : index
    %c0_4 = arith.constant 0 : index
    %3 = vector.load %arg3[%c0_3, %c0_4] : memref<1x16xf32, #tpu.memory_space<vmem>>, vector<1x16xf32>
    %4 = vector.broadcast %3 : vector<1x16xf32> to vector<8x16xf32>
    %5 = arith.addf %2, %4 : vector<8x16xf32>
    %cst_5 = arith.constant 0.000000e+00 : f32
    %6 = vector.broadcast %cst_5 : f32 to vector<8x16xf32>
    %7 = arith.maximumf %5, %6 : vector<8x16xf32>
    %c0_6 = arith.constant 0 : index
    %c0_7 = arith.constant 0 : index
    %8 = vector.load %arg4[%c0_6, %c0_7] : memref<16x4xf32, #tpu.memory_space<vmem>>, vector<16x4xf32>
    %cst_8 = arith.constant dense<0.000000e+00> : vector<8x4xf32>
    %9 = tpu.matmul %7, %8, %cst_8 {dimension_numbers = #tpu.dot_dimension_numbers<[1], [0], [0], [1], [0, 0, 1, 1], [], []>} : vector<8x16xf32>, vector<16x4xf32>, vector<8x4xf32> -> vector<8x4xf32>
    %c0_9 = arith.constant 0 : index
    %c0_10 = arith.constant 0 : index
    %10 = vector.load %arg5[%c0_9, %c0_10] : memref<1x4xf32, #tpu.memory_space<vmem>>, vector<1x4xf32>
    %11 = vector.broadcast %10 : vector<1x4xf32> to vector<8x4xf32>
    %12 = arith.addf %9, %11 : vector<8x4xf32>
    %cst_11 = arith.constant 0.000000e+00 : f32
    %13 = vector.broadcast %cst_11 : f32 to vector<8x4xf32>
    %14 = arith.maximumf %12, %13 : vector<8x4xf32>
    %c0_12 = arith.constant 0 : index
    %c0_13 = arith.constant 0 : index
    %15 = vector.load %arg6[%c0_12, %c0_13] : memref<4x1xf32, #tpu.memory_space<vmem>>, vector<4x1xf32>
    %cst_14 = arith.constant dense<0.000000e+00> : vector<8x1xf32>
    %16 = tpu.matmul %14, %15, %cst_14 {dimension_numbers = #tpu.dot_dimension_numbers<[1], [0], [0], [1], [0, 0, 1, 1], [], []>} : vector<8x4xf32>, vector<4x1xf32>, vector<8x1xf32> -> vector<8x1xf32>
    %c0_15 = arith.constant 0 : index
    %c0_16 = arith.constant 0 : index
    %17 = vector.load %arg7[%c0_15, %c0_16] : memref<1x1xf32, #tpu.memory_space<vmem>>, vector<1x1xf32>
    %18 = vector.broadcast %17 : vector<1x1xf32> to vector<8x1xf32>
    %19 = arith.addf %16, %18 : vector<8x1xf32>
    %20 = arith.negf %19 : vector<8x1xf32>
    %21 = math.exp %20 : vector<8x1xf32>
    %cst_17 = arith.constant 1.000000e+00 : f32
    %22 = vector.broadcast %cst_17 : f32 to vector<8x1xf32>
    %23 = arith.addf %22, %21 : vector<8x1xf32>
    %24 = arith.divf %22, %23 : vector<8x1xf32>
    %c0_18 = arith.constant 0 : index
    %c0_19 = arith.constant 0 : index
    %25 = vector.load %arg8[%c0_18, %c0_19] : memref<8x1xf32, #tpu.memory_space<vmem>>, vector<8x1xf32>
    tpu.vector_store %arg8[%c0_18, %c0_19], %24 {strides = array<i32>} : memref<8x1xf32, #tpu.memory_space<vmem>>, vector<8x1xf32>,
    return
  }
  func.func @transform_0(%arg0: i32) -> (i32, i32) {
    %c0_i32 = arith.constant 0 : i32
    %c0_i32_0 = arith.constant 0 : i32
    return %arg0, %c0_i32 : i32, i32
  }
  func.func @transform_1(%arg0: i32) -> (i32, i32) {
    %c0_i32 = arith.constant 0 : i32
    %c0_i32_0 = arith.constant 0 : i32
    %c0_i32_1 = arith.constant 0 : i32
    return %c0_i32, %c0_i32_0 : i32, i32
  }
  func.func @transform_2(%arg0: i32) -> (i32, i32) {
    %c0_i32 = arith.constant 0 : i32
    %c0_i32_0 = arith.constant 0 : i32
    %c0_i32_1 = arith.constant 0 : i32
    return %c0_i32, %c0_i32_0 : i32, i32
  }
  func.func @transform_3(%arg0: i32) -> (i32, i32) {
    %c0_i32 = arith.constant 0 : i32
    %c0_i32_0 = arith.constant 0 : i32
    %c0_i32_1 = arith.constant 0 : i32
    return %c0_i32, %c0_i32_0 : i32, i32
  }
  func.func @transform_4(%arg0: i32) -> (i32, i32) {
    %c0_i32 = arith.constant 0 : i32
    %c0_i32_0 = arith.constant 0 : i32
    %c0_i32_1 = arith.constant 0 : i32
    return %c0_i32, %c0_i32_0 : i32, i32
  }
  func.func @transform_5(%arg0: i32) -> (i32, i32) {
    %c0_i32 = arith.constant 0 : i32
    %c0_i32_0 = arith.constant 0 : i32
    %c0_i32_1 = arith.constant 0 : i32
    return %c0_i32, %c0_i32_0 : i32, i32
  }
  func.func @transform_6(%arg0: i32) -> (i32, i32) {
    %c0_i32 = arith.constant 0 : i32
    %c0_i32_0 = arith.constant 0 : i32
    %c0_i32_1 = arith.constant 0 : i32
    return %c0_i32, %c0_i32_0 : i32, i32
  }
  func.func @transform_7(%arg0: i32) -> (i32, i32) {
    %c0_i32 = arith.constant 0 : i32
    %c0_i32_0 = arith.constant 0 : i32
    return %arg0, %c0_i32 : i32, i32
  }
}

</mosaic_0001>

<llo_original>
// kernel: tpu_custom_call.1
$region0: #{tpu_custom_call.1}
  #allocation0 [shape = 'u32[]', space=smem, size = 0x4, offset = 0x4, fixed_abs, tag = 'smem constant byte address 0x4 - core index']
  #allocation1 [shape = 'u32[144,128]{1,0:T(1,128)}', space=vmem, size = 0x12000, scoped, tag = 'internal scratch']
  #allocation2 [shape = 'f32[1,1]{1,0:T(1,128)S(1)}', space=vmem, size = 0x200, scoped, tag = 'scoped memory for tpu_custom_call.1']
  %s0 = inlined_call_operand.vmem [shape: f32[8,32], index: 0, kind: input, shape index: {}]
  %s1 = inlined_call_operand.vmem [shape: f32[32,16], index: 1, kind: input, shape index: {}]
  %s2 = inlined_call_operand.vmem [shape: f32[1,16], index: 2, kind: input, shape index: {}]
  %s3 = inlined_call_operand.vmem [shape: f32[16,4], index: 3, kind: input, shape index: {}]
  %s4 = inlined_call_operand.vmem [shape: f32[1,4], index: 4, kind: input, shape index: {}]
  %s5 = inlined_call_operand.vmem [shape: f32[4,1], index: 5, kind: input, shape index: {}]
  %s6 = inlined_call_operand.<no memory space> [shape: f32[1,1], index: 6, kind: input, shape index: {}]
  %s7 = inlined_call_operand.vmem [shape: f32[8,1], index: 7, kind: output, shape index: {}]
  %s8 = sld [smem:[#allocation0]]
  $region38: #{tpu_custom_call.1} parent=0
    _
  %s10 = ssub.s32 1, %s8
  %s11 = scalar_select 0, %s10, %s8
  %v12 = vstv %s6
  %13 = vst [vmem:[#allocation2] sm:$0x1] %v12
  // Predicated region
  $region2: #{tpu_custom_call.1} parent=0 // pred_check
    _
  $region3: #{tpu_custom_call.1} parent=0 // pred_check_branch
    %15 = sbr.rel (0) target = $region5
  $region4: #{tpu_custom_call.1} parent=0 // pred_region
    _
  $region5: #{tpu_custom_call.1} parent=0 // pred_fallthru
    _
  // Predicated region
  $region6: #{tpu_custom_call.1} parent=0 // pred_check
    _
  $region7: #{tpu_custom_call.1} parent=0 // pred_check_branch
    %17 = sbr.rel (0) target = $region9
  $region8: #{tpu_custom_call.1} parent=0 // pred_region
    _
  $region9: #{tpu_custom_call.1} parent=0 // pred_fallthru
    _
  // Predicated region
  $region10: #{tpu_custom_call.1} parent=0 // pred_check
    _
  $region11: #{tpu_custom_call.1} parent=0 // pred_check_branch
    %19 = sbr.rel (0) target = $region13
  $region12: #{tpu_custom_call.1} parent=0 // pred_region
    _
  $region13: #{tpu_custom_call.1} parent=0 // pred_fallthru
    _
  // Predicated region
  $region14: #{tpu_custom_call.1} parent=0 // pred_check
    _
  $region15: #{tpu_custom_call.1} parent=0 // pred_check_branch
    %21 = sbr.rel (0) target = $region17
  $region16: #{tpu_custom_call.1} parent=0 // pred_region
    _
  $region17: #{tpu_custom_call.1} parent=0 // pred_fallthru
    _
  // Predicated region
  $region18: #{tpu_custom_call.1} parent=0 // pred_check
    _
  $region19: #{tpu_custom_call.1} parent=0 // pred_check_branch
    %23 = sbr.rel (0) target = $region21
  $region20: #{tpu_custom_call.1} parent=0 // pred_region
    _
  $region21: #{tpu_custom_call.1} parent=0 // pred_fallthru
    _
  // Predicated region
  $region22: #{tpu_custom_call.1} parent=0 // pred_check
    _
  $region23: #{tpu_custom_call.1} parent=0 // pred_check_branch
    %25 = sbr.rel (0) target = $region25
  $region24: #{tpu_custom_call.1} parent=0 // pred_region
    _
  $region25: #{tpu_custom_call.1} parent=0 // pred_fallthru
    _
  // Predicated region
  $region26: #{tpu_custom_call.1} parent=0 // pred_check
    _
  $region27: #{tpu_custom_call.1} parent=0 // pred_check_branch
    %27 = sbr.rel (0) target = $region29
  $region28: #{tpu_custom_call.1} parent=0 // pred_region
    _
  $region29: #{tpu_custom_call.1} parent=0 // pred_fallthru
    _
  %v28 = vld [vmem:[%s0] sm:$0xff]
  %v29 = vld [vmem:[%s1] sm:$0xff]
  %v30 = vld [vmem:[%s1 + $0x8] sm:$0xff]
  %v31 = vld [vmem:[%s1 + $0x10] sm:$0xff]
  %v32 = vld [vmem:[%s1 + $0x18] sm:$0xff]
  %v33 = vld [vmem:[%s2] sm:$0x1]
  %v35 = vlaneseq
  %v36 = vshrl.u32 %v35, 7
  %v37 = vsub.s32 0, %v36
  %v38 = vrot.slane %v33, %v37
  %vm40 = vcmask 261120
  %v42 = vsel %vm40, %v28, 0
  %44 = vmatprep.subr.mxu0 0.0
  %45 = vmatpush1.msra.mxu0 0.0
  %46 = vmatprep.subr.mxu0 0.0
  %47 = vmatpush1.msra.mxu0 0.0
  %48 = vmatprep.subr.mxu0 0.0
  %49 = vmatpush1.msra.mxu0 0.0
  %50 = vmatprep.subr.mxu0 0.0
  %51 = vmatpush1.msra.mxu0 0.0
  %52 = vmatprep.subr.mxu0 0.0
  %53 = vmatpush1.msra.mxu0 0.0
  %54 = vmatprep.subr.mxu0 0.0
  %55 = vmatpush1.msra.mxu0 0.0
  %56 = vmatprep.subr.mxu0 0.0
  %57 = vmatpush1.msra.mxu0 0.0
  %58 = vmatprep.subr.mxu0 0.0
  %59 = vmatpush1.msra.mxu0 0.0
  %60 = vmatprep.subr.mxu0 0.0
  %61 = vmatpush1.msra.mxu0 0.0
  %62 = vmatprep.subr.mxu0 0.0
  %63 = vmatpush1.msra.mxu0 0.0
  %64 = vmatprep.subr.mxu0 0.0
  %65 = vmatpush1.msra.mxu0 0.0
  %66 = vmatprep.subr.mxu0 0.0
  %67 = vmatpush1.msra.mxu0 0.0
  %68 = vmatprep.subr.mxu0 0.0
  %69 = vmatpush1.msra.mxu0 %v32
  %70 = vmatprep.subr.mxu0 0.0
  %71 = vmatpush1.msra.mxu0 %v31
  %72 = vmatprep.subr.mxu0 0.0
  %73 = vmatpush1.msra.mxu0 %v30
  %74 = vmatprep.subr.mxu0 0.0
  %75 = vmatpush1.msra.mxu0 %v29
  %76 = vmatprep.subr.mxu0 0.0
  %77 = vmatpush2.msra.mxu0 0.0
  %78 = vmatprep.subr.mxu0 0.0
  %79 = vmatpush2.msra.mxu0 0.0
  %80 = vmatprep.subr.mxu0 0.0
  %81 = vmatpush2.msra.mxu0 0.0
  %82 = vmatprep.subr.mxu0 0.0
  %83 = vmatpush2.msra.mxu0 0.0
  %84 = vmatprep.subr.mxu0 0.0
  %85 = vmatpush2.msra.mxu0 0.0
  %86 = vmatprep.subr.mxu0 0.0
  %87 = vmatpush2.msra.mxu0 0.0
  %88 = vmatprep.subr.mxu0 0.0
  %89 = vmatpush2.msra.mxu0 0.0
  %90 = vmatprep.subr.mxu0 0.0
  %91 = vmatpush2.msra.mxu0 0.0
  %92 = vmatprep.subr.mxu0 0.0
  %93 = vmatpush2.msra.mxu0 0.0
  %94 = vmatprep.subr.mxu0 0.0
  %95 = vmatpush2.msra.mxu0 0.0
  %96 = vmatprep.subr.mxu0 0.0
  %97 = vmatpush2.msra.mxu0 0.0
  %98 = vmatprep.subr.mxu0 0.0
  %99 = vmatpush2.msra.mxu0 0.0
  %100 = vmatprep.subr.mxu0 0.0
  %101 = vmatpush2.msra.mxu0 0.0
  %102 = vmatprep.subr.mxu0 0.0
  %103 = vmatpush2.msra.mxu0 0.0
  %104 = vmatprep.subr.mxu0 0.0
  %105 = vmatpush2.msra.mxu0 0.0
  %106 = vmatprep.subr.mxu0 0.0
  %107 = vmatpush2.msra.mxu0 0.0
  %108 = vmatprep.mubr.f32.mxu0 0.0
  %109 = vmatmul.mubr.f32.gmra.mxu0 %v42
  %v110 = vpop.f32.mrf.mxu0
  %v111 = vadd.f32 %v38, %v110
  %v112 = vpop.f32.mrf.mxu0
  %113 = vdwg.mxu0
  %v114 = vmax.f32 %v111, 0.0
  %v115 = vld [vmem:[%s3] sm:$0xff]
  %v116 = vld [vmem:[%s3 + $0x8] sm:$0xff]
  %v117 = vld [vmem:[%s4] sm:$0x1]
  %v119 = vlaneseq
  %v120 = vshrl.u32 %v119, 7
  %v121 = vsub.s32 0, %v120
  %v122 = vrot.slane %v117, %v121
  %vm124 = vcmask 130048
  %v126 = vsel %vm124, %v114, 0
  %128 = vmatprep.subr.mxu0 0.0
  %129 = vmatpush1.msra.mxu0 0.0
  %130 = vmatprep.subr.mxu0 0.0
  %131 = vmatpush1.msra.mxu0 0.0
  %132 = vmatprep.subr.mxu0 0.0
  %133 = vmatpush1.msra.mxu0 0.0
  %134 = vmatprep.subr.mxu0 0.0
  %135 = vmatpush1.msra.mxu0 0.0
  %136 = vmatprep.subr.mxu0 0.0
  %137 = vmatpush1.msra.mxu0 0.0
  %138 = vmatprep.subr.mxu0 0.0
  %139 = vmatpush1.msra.mxu0 0.0
  %140 = vmatprep.subr.mxu0 0.0
  %141 = vmatpush1.msra.mxu0 0.0
  %142 = vmatprep.subr.mxu0 0.0
  %143 = vmatpush1.msra.mxu0 0.0
  %144 = vmatprep.subr.mxu0 0.0
  %145 = vmatpush1.msra.mxu0 0.0
  %146 = vmatprep.subr.mxu0 0.0
  %147 = vmatpush1.msra.mxu0 0.0
  %148 = vmatprep.subr.mxu0 0.0
  %149 = vmatpush1.msra.mxu0 0.0
  %150 = vmatprep.subr.mxu0 0.0
  %151 = vmatpush1.msra.mxu0 0.0
  %152 = vmatprep.subr.mxu0 0.0
  %153 = vmatpush1.msra.mxu0 0.0
  %154 = vmatprep.subr.mxu0 0.0
  %155 = vmatpush1.msra.mxu0 0.0
  %156 = vmatprep.subr.mxu0 0.0
  %157 = vmatpush1.msra.mxu0 %v116
  %158 = vmatprep.subr.mxu0 0.0
  %159 = vmatpush1.msra.mxu0 %v115
  %160 = vmatprep.subr.mxu0 0.0
  %161 = vmatpush2.msra.mxu0 0.0
  %162 = vmatprep.subr.mxu0 0.0
  %163 = vmatpush2.msra.mxu0 0.0
  %164 = vmatprep.subr.mxu0 0.0
  %165 = vmatpush2.msra.mxu0 0.0
  %166 = vmatprep.subr.mxu0 0.0
  %167 = vmatpush2.msra.mxu0 0.0
  %168 = vmatprep.subr.mxu0 0.0
  %169 = vmatpush2.msra.mxu0 0.0
  %170 = vmatprep.subr.mxu0 0.0
  %171 = vmatpush2.msra.mxu0 0.0
  %172 = vmatprep.subr.mxu0 0.0
  %173 = vmatpush2.msra.mxu0 0.0
  %174 = vmatprep.subr.mxu0 0.0
  %175 = vmatpush2.msra.mxu0 0.0
  %176 = vmatprep.subr.mxu0 0.0
  %177 = vmatpush2.msra.mxu0 0.0
  %178 = vmatprep.subr.mxu0 0.0
  %179 = vmatpush2.msra.mxu0 0.0
  %180 = vmatprep.subr.mxu0 0.0
  %181 = vmatpush2.msra.mxu0 0.0
  %182 = vmatprep.subr.mxu0 0.0
  %183 = vmatpush2.msra.mxu0 0.0
  %184 = vmatprep.subr.mxu0 0.0
  %185 = vmatpush2.msra.mxu0 0.0
  %186 = vmatprep.subr.mxu0 0.0
  %187 = vmatpush2.msra.mxu0 0.0
  %188 = vmatprep.subr.mxu0 0.0
  %189 = vmatpush2.msra.mxu0 0.0
  %190 = vmatprep.subr.mxu0 0.0
  %191 = vmatpush2.msra.mxu0 0.0
  %192 = vmatprep.mubr.f32.mxu0 0.0
  %193 = vmatmul.mubr.f32.gmra.mxu0 %v126
  %v194 = vpop.f32.mrf.mxu0
  %v195 = vadd.f32 %v122, %v194
  %v196 = vpop.f32.mrf.mxu0
  %197 = vdwg.mxu0
  %v198 = vmax.f32 %v195, 0.0
  %v199 = vld [vmem:[%s5] sm:$0xf]
  %v200 = vld [vmem:[#allocation2] sm:$0x1]
  %v202 = vlaneseq
  %v203 = vshrl.u32 %v202, 7
  %v204 = vsub.s32 0, %v203
  %v205 = vrot.slane %v200, %v204
  %vm207 = vcmask 31744
  %v209 = vsel %vm207, %v198, 0
  %vm211 = vcmask 1043456
  %v213 = vsel %vm211, %v199, 0
  %215 = vmatprep.subr.mxu0 0.0
  %216 = vmatpush1.msra.mxu0 0.0
  %217 = vmatprep.subr.mxu0 0.0
  %218 = vmatpush1.msra.mxu0 0.0
  %219 = vmatprep.subr.mxu0 0.0
  %220 = vmatpush1.msra.mxu0 0.0
  %221 = vmatprep.subr.mxu0 0.0
  %222 = vmatpush1.msra.mxu0 0.0
  %223 = vmatprep.subr.mxu0 0.0
  %224 = vmatpush1.msra.mxu0 0.0
  %225 = vmatprep.subr.mxu0 0.0
  %226 = vmatpush1.msra.mxu0 0.0
  %227 = vmatprep.subr.mxu0 0.0
  %228 = vmatpush1.msra.mxu0 0.0
  %229 = vmatprep.subr.mxu0 0.0
  %230 = vmatpush1.msra.mxu0 0.0
  %231 = vmatprep.subr.mxu0 0.0
  %232 = vmatpush1.msra.mxu0 0.0
  %233 = vmatprep.subr.mxu0 0.0
  %234 = vmatpush1.msra.mxu0 0.0
  %235 = vmatprep.subr.mxu0 0.0
  %236 = vmatpush1.msra.mxu0 0.0
  %237 = vmatprep.subr.mxu0 0.0
  %238 = vmatpush1.msra.mxu0 0.0
  %239 = vmatprep.subr.mxu0 0.0
  %240 = vmatpush1.msra.mxu0 0.0
  %241 = vmatprep.subr.mxu0 0.0
  %242 = vmatpush1.msra.mxu0 0.0
  %243 = vmatprep.subr.mxu0 0.0
  %244 = vmatpush1.msra.mxu0 0.0
  %245 = vmatprep.subr.mxu0 0.0
  %246 = vmatpush1.msra.mxu0 %v213
  %247 = vmatprep.subr.mxu0 0.0
  %248 = vmatpush2.msra.mxu0 0.0
  %249 = vmatprep.subr.mxu0 0.0
  %250 = vmatpush2.msra.mxu0 0.0
  %251 = vmatprep.subr.mxu0 0.0
  %252 = vmatpush2.msra.mxu0 0.0
  %253 = vmatprep.subr.mxu0 0.0
  %254 = vmatpush2.msra.mxu0 0.0
  %255 = vmatprep.subr.mxu0 0.0
  %256 = vmatpush2.msra.mxu0 0.0
  %257 = vmatprep.subr.mxu0 0.0
  %258 = vmatpush2.msra.mxu0 0.0
  %259 = vmatprep.subr.mxu0 0.0
  %260 = vmatpush2.msra.mxu0 0.0
  %261 = vmatprep.subr.mxu0 0.0
  %262 = vmatpush2.msra.mxu0 0.0
  %263 = vmatprep.subr.mxu0 0.0
  %264 = vmatpush2.msra.mxu0 0.0
  %265 = vmatprep.subr.mxu0 0.0
  %266 = vmatpush2.msra.mxu0 0.0
  %267 = vmatprep.subr.mxu0 0.0
  %268 = vmatpush2.msra.mxu0 0.0
  %269 = vmatprep.subr.mxu0 0.0
  %270 = vmatpush2.msra.mxu0 0.0
  %271 = vmatprep.subr.mxu0 0.0
  %272 = vmatpush2.msra.mxu0 0.0
  %273 = vmatprep.subr.mxu0 0.0
  %274 = vmatpush2.msra.mxu0 0.0
  %275 = vmatprep.subr.mxu0 0.0
  %276 = vmatpush2.msra.mxu0 0.0
  %277 = vmatprep.subr.mxu0 0.0
  %278 = vmatpush2.msra.mxu0 0.0
  %279 = vmatprep.mubr.f32.mxu0 0.0
  %280 = vmatmul.mubr.f32.gmra.mxu0 %v209
  %v281 = vpop.f32.mrf.mxu0
  %v282 = vadd.f32 %v205, %v281
  %v283 = vpop.f32.mrf.mxu0
  %284 = vdwg.mxu0
  %v285 = vxor.u32 %v282, 2147483648
  %v286 = vmul.f32 %v285, 1.442695
  %v287 = vpow.pop %v286
  %v288 = vadd.f32 %v287, 1.0
  %v289 = vrcp.pop %v288
  %v290 = vmul.f32 1.0, %v289
  %vm291 = vcmask 7168
  %292 = vst.msk [vmem:[%s7] sm:$0xff] %vm291, %v290
  // Predicated region
  $region30: #{tpu_custom_call.1} parent=0 // pred_check
    _
  $region31: #{tpu_custom_call.1} parent=0 // pred_check_branch
    %294 = sbr.rel (0) target = $region33
  $region32: #{tpu_custom_call.1} parent=0 // pred_region
    _
  $region33: #{tpu_custom_call.1} parent=0 // pred_fallthru
    _
  // Predicated region
  $region34: #{tpu_custom_call.1} parent=0 // pred_check
    _
  $region35: #{tpu_custom_call.1} parent=0 // pred_check_branch
    %296 = sbr.rel (0) target = $region37
  $region36: #{tpu_custom_call.1} parent=0 // pred_region
    _
  $region37: #{tpu_custom_call.1} parent=0 // pred_fallthru
    _

</llo_original>
